<compile_context>
chip_gen: v6e
topology: v6e:2x2x1
jax: 0.10.0
libtpu: 0.0.40
codegen_flags: <defaults>
</compile_context>

<pallas_src>
import functools

import jax
import jax.numpy as jnp
from jax.experimental import pallas as pl
from jax.experimental.pallas import tpu as pltpu

ACT_BITS = 8       # QuantAct activation bits (symmetric input, asymmetric after ReLU)
WEIGHT_BITS = 8    # QuantConv2d per-output-channel weight bits
FREXP_BITS = 31    # batch_frexp mantissa bits (scale = m * 2**-e, m integer)


def _entropy_params_kernel(hs_ref,
                           x_ref,
                           w1_ref, sw1_ref, b1_ref,
                           w2_ref, sw2_ref, b2_ref,
                           w3_ref, sw3_ref, b3_ref,
                           o_ref,
                           *, en_left):
    f32 = jnp.float32
    bf16 = jnp.bfloat16
    n_sym = 2.0 ** (ACT_BITS - 1) - 1.0      # 127
    n_asym = 2.0 ** ACT_BITS - 1.0           # 255

    x = x_ref[...]                            # (T, Cin) f32

    # ---- quant_input: symmetric 8-bit ------------------------------------
    # x0 = x * 2^-hs ; s0 = max|x0|/127 ; x0_int = clip(round(x0/s0), -128, 127)
    # The power-of-two factor 2^-hs cancels exactly inside the quantization
    # ratio, so only the scalar scale s0 carries it (no (T, Cin) pre-scale pass).
    maxabs = jnp.max(jnp.abs(x))
    s0_base = jnp.where(maxabs > 0.0, maxabs / n_sym, 1.0)
    x0_int = jnp.clip(jnp.round(x / s0_base), -n_sym - 1.0, n_sym)
    hs = hs_ref[0].astype(f32)
    s0 = s0_base * jnp.exp2(-hs)              # act scaling factor of quant_input

    # ---- conv1: integer matmul (bf16 operands, f32 accumulate on MXU) -----
    sw1 = sw1_ref[...]                        # (1, C1) per-out-channel weight scale
    sc1 = s0 * sw1                            # conv1 dequant scale
    b1_int = jnp.round(b1_ref[...] / sc1)
    acc1 = jnp.dot(x0_int.astype(bf16), w1_ref[...],
                   preferred_element_type=jnp.float32) + b1_int

    # ---- fused dequant + ReLU + quant_act1 (asymmetric, zero_point == 0) ---
    # max(relu(acc1 * sc1)) == max(0, max_c(colmax_c * sc1_c)) since sc1 > 0.
    col_max1 = jnp.max(acc1, axis=0, keepdims=True)     # (1, C1) sublane reduce
    m1 = jnp.maximum(jnp.max(col_max1 * sc1), 0.0)
    s1 = jnp.where(m1 > 0.0, m1 / n_asym, 1.0)
    f1 = sc1 / s1                                        # folded requant factor
    x1_int = jnp.clip(jnp.round(acc1 * f1), 0.0, n_asym)  # clip@0 subsumes ReLU

    # ---- conv2 -------------------------------------------------------------
    sw2 = sw2_ref[...]
    sc2 = s1 * sw2
    b2_int = jnp.round(b2_ref[...] / sc2)
    acc2 = jnp.dot(x1_int.astype(bf16), w2_ref[...],
                   preferred_element_type=jnp.float32) + b2_int

    col_max2 = jnp.max(acc2, axis=0, keepdims=True)
    m2 = jnp.maximum(jnp.max(col_max2 * sc2), 0.0)
    s2 = jnp.where(m2 > 0.0, m2 / n_asym, 1.0)
    f2 = sc2 / s2
    x2_int = jnp.clip(jnp.round(acc2 * f2), 0.0, n_asym)

    # ---- conv3: keep integer accumulator (no dequant) ----------------------
    sw3 = sw3_ref[...]
    sc3 = s2 * sw3                                       # (1, C3_pad)
    b3_int = jnp.round(b3_ref[...] / sc3)
    acc3 = jnp.dot(x2_int.astype(bf16), w3_ref[...],
                   preferred_element_type=jnp.float32) + b3_int

    # ---- batch_frexp dyadic rescale ----------------------------------------
    # scale = m0 * 2**e_frexp with m0 in [0.5, 1); m = round(m0 * 2**31), e = 31 - e_frexp
    e_frexp = jnp.floor(jnp.log2(sc3)) + 1.0
    m = jnp.round(sc3 * jnp.exp2(-e_frexp) * (2.0 ** FREXP_BITS))
    e = FREXP_BITS - e_frexp
    y = jnp.round(acc3 * m * jnp.exp2(-(e - float(en_left))))
    o_ref[...] = y * (2.0 ** (-float(en_left)))


def _quantize_weight_per_channel(w):
    """Symmetric per-output-channel 8-bit weight quantization. w: (Cin, Cout).

    Returns (w_int as bf16 — exact, values in [-128, 127] — , scale as f32)."""
    n = 2.0 ** (WEIGHT_BITS - 1) - 1.0
    w = w.astype(jnp.float32)
    s = jnp.max(jnp.abs(w), axis=0, keepdims=True) / n          # (1, Cout)
    s = jnp.where(s > 0.0, s, 1.0)
    w_int = jnp.clip(jnp.round(w / s), -n - 1.0, n)
    return w_int.astype(jnp.bfloat16), s.astype(jnp.float32)


def entropy_parameters_forward(x_nchw, hs_left, params, en_left):
    """params = ((w1, b1), (w2, b2), (w3, b3)) with w: (Cin, Cout), b: (Cout,)."""
    (w1, b1), (w2, b2), (w3, b3) = params
    nb, cin, h, w = x_nchw.shape
    t = nb * h * w
    c1, c2, c3 = w1.shape[1], w2.shape[1], w3.shape[1]
    c3_pad = ((c3 + 127) // 128) * 128       # lane-dense output store

    x_flat = jnp.transpose(x_nchw, (0, 2, 3, 1)).reshape(t, cin).astype(jnp.float32)

    w1_i, sw1 = _quantize_weight_per_channel(w1)
    w2_i, sw2 = _quantize_weight_per_channel(w2)
    w3_i, sw3 = _quantize_weight_per_channel(w3)

    b1f = b1.reshape(1, -1).astype(jnp.float32)
    b2f = b2.reshape(1, -1).astype(jnp.float32)
    b3f = b3.reshape(1, -1).astype(jnp.float32)

    # Zero-pad conv3 output channels to a lane-dense width.  Padded columns get
    # weight 0 / bias 0 / scale 1 (so no 0-divisions or log2(0)); they produce
    # exact zeros and are sliced off below.
    pad = c3_pad - c3
    if pad:
        w3_i = jnp.pad(w3_i, ((0, 0), (0, pad)))
        sw3 = jnp.pad(sw3, ((0, 0), (0, pad)), constant_values=1.0)
        b3f = jnp.pad(b3f, ((0, 0), (0, pad)))

    # VMEM budget: single whole-T block (no grid), so x, the output and every
    # (T, C) intermediate are co-resident.  Rough per-row byte estimate, x2 margin.
    est = t * (6 * cin + 10 * c1 + 10 * c2 + 12 * c3_pad) + (1 << 21)
    vmem_limit = int(min(max(2 * est, 32 << 20), 64 << 20))

    vmem = pl.BlockSpec(memory_space=pltpu.MemorySpace.VMEM)
    smem = pl.BlockSpec(memory_space=pltpu.MemorySpace.SMEM)

    kernel = functools.partial(_entropy_params_kernel, en_left=en_left)

    y_flat = pl.pallas_call(
        kernel,
        out_shape=jax.ShapeDtypeStruct((t, c3_pad), jnp.float32),
        in_specs=[smem,                      # hs_left scalar
                  vmem,                      # x
                  vmem, vmem, vmem,          # conv1: w_int(bf16), w_scale, bias
                  vmem, vmem, vmem,          # conv2
                  vmem, vmem, vmem],         # conv3
        out_specs=vmem,
        compiler_params=pltpu.CompilerParams(vmem_limit_bytes=vmem_limit),
    )(jnp.asarray([hs_left], jnp.int32), x_flat,
      w1_i, sw1, b1f,
      w2_i, sw2, b2f,
      w3_i, sw3, b3f)

    # drop the lane padding, back to NCHW (PyTorch convention)
    return y_flat[:, :c3].reshape(nb, h, w, c3).transpose(0, 3, 1, 2)


if __name__ == "__main__":
    # Channel sizes follow the standard entropy_parameters head:
    #   Cin = M*12//3, C1 = M*10//3, C2 = M*8//3, C3 = M*6//3
    M = 12
    CIN, C1, C2, C3 = M * 12 // 3, M * 10 // 3, M * 8 // 3, M * 6 // 3   # 48, 40, 32, 24
    NB, H, W = 2, 8, 8
    EN_LEFT = 8
    HS_LEFT = 8

    key = jax.random.PRNGKey(0)
    kx, k1, k2, k3, kb1, kb2, kb3 = jax.random.split(key, 7)

    # Input lives on a "left-shifted" fixed-point grid, hence the large scale.
    x = jax.random.normal(kx, (NB, CIN, H, W), jnp.float32) * (2.0 ** HS_LEFT)

    params = (
        (jax.random.normal(k1, (CIN, C1), jnp.float32) * 0.10,
         jax.random.normal(kb1, (C1,), jnp.float32) * 0.01),
        (jax.random.normal(k2, (C1, C2), jnp.float32) * 0.10,
         jax.random.normal(kb2, (C2,), jnp.float32) * 0.01),
        (jax.random.normal(k3, (C2, C3), jnp.float32) * 0.10,
         jax.random.normal(kb3, (C3,), jnp.float32) * 0.01),
    )

    y = entropy_parameters_forward(x, HS_LEFT, params, EN_LEFT)
    jax.block_until_ready(y)
    assert y.shape == (NB, C3, H, W)
    assert bool(jnp.all(jnp.isfinite(y)))
    print("KERNEL_OK")
</pallas_src>

<mosaic_0001>
module attributes {stable_mosaic.version = 11 : i64} {
  func.func @_entropy_params_kernel(%arg0: memref<1xi32, #tpu.memory_space<smem>>, %arg1: memref<128x48xf32, #tpu.memory_space<vmem>>, %arg2: memref<48x40xbf16, #tpu.memory_space<vmem>>, %arg3: memref<1x40xf32, #tpu.memory_space<vmem>>, %arg4: memref<1x40xf32, #tpu.memory_space<vmem>>, %arg5: memref<40x32xbf16, #tpu.memory_space<vmem>>, %arg6: memref<1x32xf32, #tpu.memory_space<vmem>>, %arg7: memref<1x32xf32, #tpu.memory_space<vmem>>, %arg8: memref<32x128xbf16, #tpu.memory_space<vmem>>, %arg9: memref<1x128xf32, #tpu.memory_space<vmem>>, %arg10: memref<1x128xf32, #tpu.memory_space<vmem>>, %arg11: memref<128x128xf32, #tpu.memory_space<vmem>>) attributes {dimension_semantics = [], scalar_prefetch = 0 : i64, scratch_operands = 0 : i64, tpu.core_type = #tpu.core_type<tc>} {
    %c0 = arith.constant 0 : index
    %c0_0 = arith.constant 0 : index
    %0 = vector.load %arg1[%c0, %c0_0] : memref<128x48xf32, #tpu.memory_space<vmem>>, vector<128x48xf32>
    %1 = math.absf %0 : vector<128x48xf32>
    %2 = vector.shape_cast %1 : vector<128x48xf32> to vector<1x128x48xf32>
    %cst = arith.constant dense<0xFF800000> : vector<1xf32>
    %3 = vector.multi_reduction <maximumf>, %2, %cst [1, 2] : vector<1x128x48xf32> to vector<1xf32>
    %4 = vector.shape_cast %3 : vector<1xf32> to vector<1x1x1xf32>
    %5 = vector.extract %4[0, 0, 0] : f32 from vector<1x1x1xf32>
    %cst_1 = arith.constant 0.000000e+00 : f32
    %6 = arith.cmpf ogt, %5, %cst_1 : f32
    %cst_2 = arith.constant 1.270000e+02 : f32
    %7 = arith.divf %5, %cst_2 : f32
    %cst_3 = arith.constant 1.000000e+00 : f32
    %8 = arith.select %6, %7, %cst_3 : f32
    %9 = vector.broadcast %8 : f32 to vector<128x48xf32>
    %10 = arith.divf %0, %9 : vector<128x48xf32>
    %11 = math.roundeven %10 : vector<128x48xf32>
    %cst_4 = arith.constant -1.280000e+02 : f32
    %cst_5 = arith.constant 1.270000e+02 : f32
    %12 = vector.broadcast %cst_4 : f32 to vector<128x48xf32>
    %13 = arith.maximumf %12, %11 : vector<128x48xf32>
    %14 = vector.broadcast %cst_5 : f32 to vector<128x48xf32>
    %15 = arith.minimumf %14, %13 : vector<128x48xf32>
    %c0_6 = arith.constant 0 : index
    %16 = memref.load %arg0[%c0_6] : memref<1xi32, #tpu.memory_space<smem>>
    %17 = arith.sitofp %16 : i32 to f32
    %cst_7 = arith.constant 0.000000e+00 : f32
    %18 = arith.subf %cst_7, %17 : f32
    %19 = math.exp2 %18 : f32
    %20 = arith.mulf %8, %19 : f32
    %c0_8 = arith.constant 0 : index
    %c0_9 = arith.constant 0 : index
    %21 = vector.load %arg3[%c0_8, %c0_9] : memref<1x40xf32, #tpu.memory_space<vmem>>, vector<1x40xf32>
    %22 = vector.broadcast %20 : f32 to vector<1x40xf32>
    %23 = arith.mulf %22, %21 : vector<1x40xf32>
    %c0_10 = arith.constant 0 : index
    %c0_11 = arith.constant 0 : index
    %24 = vector.load %arg4[%c0_10, %c0_11] : memref<1x40xf32, #tpu.memory_space<vmem>>, vector<1x40xf32>
    %25 = arith.divf %24, %23 : vector<1x40xf32>
    %26 = math.roundeven %25 : vector<1x40xf32>
    %27 = arith.truncf %15 : vector<128x48xf32> to vector<128x48xbf16>
    %c0_12 = arith.constant 0 : index
    %c0_13 = arith.constant 0 : index
    %28 = vector.load %arg2[%c0_12, %c0_13] : memref<48x40xbf16, #tpu.memory_space<vmem>>, vector<48x40xbf16>
    %cst_14 = arith.constant dense<0.000000e+00> : vector<128x40xf32>
    %29 = tpu.matmul %27, %28, %cst_14 {dimension_numbers = #tpu.dot_dimension_numbers<[1], [0], [0], [1], [0, 0, 1, 1], [], []>} : vector<128x48xbf16>, vector<48x40xbf16>, vector<128x40xf32> -> vector<128x40xf32>
    %30 = vector.broadcast %26 : vector<1x40xf32> to vector<128x40xf32>
    %31 = arith.addf %29, %30 : vector<128x40xf32>
    %cst_15 = arith.constant dense<0xFF800000> : vector<40xf32>
    %32 = vector.multi_reduction <maximumf>, %31, %cst_15 [0] : vector<128x40xf32> to vector<40xf32>
    %33 = vector.shape_cast %32 : vector<40xf32> to vector<1x40xf32>
    %34 = arith.mulf %33, %23 : vector<1x40xf32>
    %35 = vector.shape_cast %34 : vector<1x40xf32> to vector<1x1x40xf32>
    %cst_16 = arith.constant dense<0xFF800000> : vector<1xf32>
    %36 = vector.multi_reduction <maximumf>, %35, %cst_16 [1, 2] : vector<1x1x40xf32> to vector<1xf32>
    %37 = vector.shape_cast %36 : vector<1xf32> to vector<1x1x1xf32>
    %38 = vector.extract %37[0, 0, 0] : f32 from vector<1x1x1xf32>
    %cst_17 = arith.constant 0.000000e+00 : f32
    %39 = arith.maximumf %38, %cst_17 : f32
    %cst_18 = arith.constant 0.000000e+00 : f32
    %40 = arith.cmpf ogt, %39, %cst_18 : f32
    %cst_19 = arith.constant 2.550000e+02 : f32
    %41 = arith.divf %39, %cst_19 : f32
    %cst_20 = arith.constant 1.000000e+00 : f32
    %42 = arith.select %40, %41, %cst_20 : f32
    %43 = vector.broadcast %42 : f32 to vector<1x40xf32>
    %44 = arith.divf %23, %43 : vector<1x40xf32>
    %45 = vector.broadcast %44 : vector<1x40xf32> to vector<128x40xf32>
    %46 = arith.mulf %31, %45 : vector<128x40xf32>
    %47 = math.roundeven %46 : vector<128x40xf32>
    %cst_21 = arith.constant 0.000000e+00 : f32
    %cst_22 = arith.constant 2.550000e+02 : f32
    %48 = vector.broadcast %cst_21 : f32 to vector<128x40xf32>
    %49 = arith.maximumf %48, %47 : vector<128x40xf32>
    %50 = vector.broadcast %cst_22 : f32 to vector<128x40xf32>
    %51 = arith.minimumf %50, %49 : vector<128x40xf32>
    %c0_23 = arith.constant 0 : index
    %c0_24 = arith.constant 0 : index
    %52 = vector.load %arg6[%c0_23, %c0_24] : memref<1x32xf32, #tpu.memory_space<vmem>>, vector<1x32xf32>
    %53 = vector.broadcast %42 : f32 to vector<1x32xf32>
    %54 = arith.mulf %53, %52 : vector<1x32xf32>
    %c0_25 = arith.constant 0 : index
    %c0_26 = arith.constant 0 : index
    %55 = vector.load %arg7[%c0_25, %c0_26] : memref<1x32xf32, #tpu.memory_space<vmem>>, vector<1x32xf32>
    %56 = arith.divf %55, %54 : vector<1x32xf32>
    %57 = math.roundeven %56 : vector<1x32xf32>
    %58 = arith.truncf %51 : vector<128x40xf32> to vector<128x40xbf16>
    %c0_27 = arith.constant 0 : index
    %c0_28 = arith.constant 0 : index
    %59 = vector.load %arg5[%c0_27, %c0_28] : memref<40x32xbf16, #tpu.memory_space<vmem>>, vector<40x32xbf16>
    %cst_29 = arith.constant dense<0.000000e+00> : vector<128x32xf32>
    %60 = tpu.matmul %58, %59, %cst_29 {dimension_numbers = #tpu.dot_dimension_numbers<[1], [0], [0], [1], [0, 0, 1, 1], [], []>} : vector<128x40xbf16>, vector<40x32xbf16>, vector<128x32xf32> -> vector<128x32xf32>
    %61 = vector.broadcast %57 : vector<1x32xf32> to vector<128x32xf32>
    %62 = arith.addf %60, %61 : vector<128x32xf32>
    %cst_30 = arith.constant dense<0xFF800000> : vector<32xf32>
    %63 = vector.multi_reduction <maximumf>, %62, %cst_30 [0] : vector<128x32xf32> to vector<32xf32>
    %64 = vector.shape_cast %63 : vector<32xf32> to vector<1x32xf32>
    %65 = arith.mulf %64, %54 : vector<1x32xf32>
    %66 = vector.shape_cast %65 : vector<1x32xf32> to vector<1x1x32xf32>
    %cst_31 = arith.constant dense<0xFF800000> : vector<1xf32>
    %67 = vector.multi_reduction <maximumf>, %66, %cst_31 [1, 2] : vector<1x1x32xf32> to vector<1xf32>
    %68 = vector.shape_cast %67 : vector<1xf32> to vector<1x1x1xf32>
    %69 = vector.extract %68[0, 0, 0] : f32 from vector<1x1x1xf32>
    %cst_32 = arith.constant 0.000000e+00 : f32
    %70 = arith.maximumf %69, %cst_32 : f32
    %cst_33 = arith.constant 0.000000e+00 : f32
    %71 = arith.cmpf ogt, %70, %cst_33 : f32
    %cst_34 = arith.constant 2.550000e+02 : f32
    %72 = arith.divf %70, %cst_34 : f32
    %cst_35 = arith.constant 1.000000e+00 : f32
    %73 = arith.select %71, %72, %cst_35 : f32
    %74 = vector.broadcast %73 : f32 to vector<1x32xf32>
    %75 = arith.divf %54, %74 : vector<1x32xf32>
    %76 = vector.broadcast %75 : vector<1x32xf32> to vector<128x32xf32>
    %77 = arith.mulf %62, %76 : vector<128x32xf32>
    %78 = math.roundeven %77 : vector<128x32xf32>
    %cst_36 = arith.constant 0.000000e+00 : f32
    %cst_37 = arith.constant 2.550000e+02 : f32
    %79 = vector.broadcast %cst_36 : f32 to vector<128x32xf32>
    %80 = arith.maximumf %79, %78 : vector<128x32xf32>
    %81 = vector.broadcast %cst_37 : f32 to vector<128x32xf32>
    %82 = arith.minimumf %81, %80 : vector<128x32xf32>
    %c0_38 = arith.constant 0 : index
    %c0_39 = arith.constant 0 : index
    %83 = vector.load %arg9[%c0_38, %c0_39] : memref<1x128xf32, #tpu.memory_space<vmem>>, vector<1x128xf32>
    %84 = vector.broadcast %73 : f32 to vector<1x128xf32>
    %85 = arith.mulf %84, %83 : vector<1x128xf32>
    %c0_40 = arith.constant 0 : index
    %c0_41 = arith.constant 0 : index
    %86 = vector.load %arg10[%c0_40, %c0_41] : memref<1x128xf32, #tpu.memory_space<vmem>>, vector<1x128xf32>
    %87 = arith.divf %86, %85 : vector<1x128xf32>
    %88 = math.roundeven %87 : vector<1x128xf32>
    %89 = arith.truncf %82 : vector<128x32xf32> to vector<128x32xbf16>
    %c0_42 = arith.constant 0 : index
    %c0_43 = arith.constant 0 : index
    %90 = vector.load %arg8[%c0_42, %c0_43] : memref<32x128xbf16, #tpu.memory_space<vmem>>, vector<32x128xbf16>
    %cst_44 = arith.constant dense<0.000000e+00> : vector<128x128xf32>
    %91 = tpu.matmul %89, %90, %cst_44 {dimension_numbers = #tpu.dot_dimension_numbers<[1], [0], [0], [1], [0, 0, 1, 1], [], []>} : vector<128x32xbf16>, vector<32x128xbf16>, vector<128x128xf32> -> vector<128x128xf32>
    %92 = vector.broadcast %88 : vector<1x128xf32> to vector<128x128xf32>
    %93 = arith.addf %91, %92 : vector<128x128xf32>
    %94 = math.log %85 : vector<1x128xf32>
    %cst_45 = arith.constant 2.000000e+00 : f32
    %95 = math.log %cst_45 : f32
    %96 = vector.broadcast %95 : f32 to vector<1x128xf32>
    %97 = arith.divf %94, %96 : vector<1x128xf32>
    %98 = math.floor %97 : vector<1x128xf32>
    %cst_46 = arith.constant 1.000000e+00 : f32
    %99 = vector.broadcast %cst_46 : f32 to vector<1x128xf32>
    %100 = arith.addf %98, %99 : vector<1x128xf32>
    %cst_47 = arith.constant 0.000000e+00 : f32
    %101 = vector.broadcast %cst_47 : f32 to vector<1x128xf32>
    %102 = arith.subf %101, %100 : vector<1x128xf32>
    %103 = math.exp2 %102 : vector<1x128xf32>
    %104 = arith.mulf %85, %103 : vector<1x128xf32>
    %cst_48 = arith.constant 2.14748365E+9 : f32
    %105 = vector.broadcast %cst_48 : f32 to vector<1x128xf32>
    %106 = arith.mulf %104, %105 : vector<1x128xf32>
    %107 = math.roundeven %106 : vector<1x128xf32>
    %cst_49 = arith.constant 3.100000e+01 : f32
    %108 = vector.broadcast %cst_49 : f32 to vector<1x128xf32>
    %109 = arith.subf %108, %100 : vector<1x128xf32>
    %110 = vector.broadcast %107 : vector<1x128xf32> to vector<128x128xf32>
    %111 = arith.mulf %93, %110 : vector<128x128xf32>
    %cst_50 = arith.constant 8.000000e+00 : f32
    %112 = vector.broadcast %cst_50 : f32 to vector<1x128xf32>
    %113 = arith.subf %109, %112 : vector<1x128xf32>
    %cst_51 = arith.constant 0.000000e+00 : f32
    %114 = vector.broadcast %cst_51 : f32 to vector<1x128xf32>
    %115 = arith.subf %114, %113 : vector<1x128xf32>
    %116 = math.exp2 %115 : vector<1x128xf32>
    %117 = vector.broadcast %116 : vector<1x128xf32> to vector<128x128xf32>
    %118 = arith.mulf %111, %117 : vector<128x128xf32>
    %119 = math.roundeven %118 : vector<128x128xf32>
    %cst_52 = arith.constant 3.906250e-03 : f32
    %120 = vector.broadcast %cst_52 : f32 to vector<128x128xf32>
    %121 = arith.mulf %119, %120 : vector<128x128xf32>
    %c0_53 = arith.constant 0 : index
    %c0_54 = arith.constant 0 : index
    %122 = vector.load %arg11[%c0_53, %c0_54] : memref<128x128xf32, #tpu.memory_space<vmem>>, vector<128x128xf32>
    tpu.vector_store %arg11[%c0_53, %c0_54], %121 {strides = array<i32>} : memref<128x128xf32, #tpu.memory_space<vmem>>, vector<128x128xf32>,
    return
  }
}

</mosaic_0001>

<llo_original>
// kernel: tpu_custom_call.1
$region0: #{tpu_custom_call.1}
  #allocation0 [shape = 'u32[]', space=smem, size = 0x4, offset = 0x4, fixed_abs, tag = 'smem constant byte address 0x4 - core index']
  #allocation1 [shape = 'u32[144,128]{1,0:T(1,128)}', space=vmem, size = 0x12000, scoped, tag = 'internal scratch']
  #allocation2 [shape = 's32[1]{0:T(128)S(6)}', space=smem, size = 0x200, scoped, tag = 'scoped memory for tpu_custom_call.1']
  %s0 = inlined_call_operand.<no memory space> [shape: s32[1], index: 0, kind: input, shape index: {}]
  %s1 = inlined_call_operand.vmem [shape: f32[128,48], index: 1, kind: input, shape index: {}]
  %s2 = inlined_call_operand.vmem [shape: bf16[48,40], index: 2, kind: input, shape index: {}]
  %s3 = inlined_call_operand.vmem [shape: f32[1,40], index: 3, kind: input, shape index: {}]
  %s4 = inlined_call_operand.vmem [shape: f32[1,40], index: 4, kind: input, shape index: {}]
  %s5 = inlined_call_operand.vmem [shape: bf16[40,32], index: 5, kind: input, shape index: {}]
  %s6 = inlined_call_operand.vmem [shape: f32[1,32], index: 6, kind: input, shape index: {}]
  %s7 = inlined_call_operand.vmem [shape: f32[1,32], index: 7, kind: input, shape index: {}]
  %s8 = inlined_call_operand.vmem [shape: bf16[32,128], index: 8, kind: input, shape index: {}]
  %s9 = inlined_call_operand.vmem [shape: f32[1,128], index: 9, kind: input, shape index: {}]
  %s10 = inlined_call_operand.vmem [shape: f32[1,128], index: 10, kind: input, shape index: {}]
  %s11 = inlined_call_operand.hbm [shape: f32[128,128], index: 11, kind: output, shape index: {}]
  %s12 = sld [smem:[#allocation0]]
  $region54: #{tpu_custom_call.1} parent=0
    _
  %s14 = ssub.s32 1, %s12
  %s15 = scalar_select 0, %s14, %s12
  %16 = sst [smem:[#allocation2]] %s0
  $region1: #{tpu_custom_call.1} parent=0
    #allocation3 [shape = 'u8[65536]{0}', space=vmem, size = 0x10000, scoped, tag = 'output window, operand 0, single buffered']
    #allocation4 [shape = 's32[1]{0}', space=sflag, size = 0x4, scoped, tag = 'scoped memory for tpu_custom_call.1']
    %17 = vsyncpa [#allocation4], 0
    // Predicated region
    $region2: #{tpu_custom_call.1} parent=1 // pred_check
      _
    $region3: #{tpu_custom_call.1} parent=1 // pred_check_branch
      %19 = sbr.rel (0) target = $region5
    $region4: #{tpu_custom_call.1} parent=1 // pred_region
      _
    $region5: #{tpu_custom_call.1} parent=1 // pred_fallthru
      _
    // Predicated region
    $region6: #{tpu_custom_call.1} parent=1 // pred_check
      _
    $region7: #{tpu_custom_call.1} parent=1 // pred_check_branch
      %21 = sbr.rel (0) target = $region9
    $region8: #{tpu_custom_call.1} parent=1 // pred_region
      _
    $region9: #{tpu_custom_call.1} parent=1 // pred_fallthru
      _
    // Predicated region
    $region10: #{tpu_custom_call.1} parent=1 // pred_check
      _
    $region11: #{tpu_custom_call.1} parent=1 // pred_check_branch
      %23 = sbr.rel (0) target = $region13
    $region12: #{tpu_custom_call.1} parent=1 // pred_region
      _
    $region13: #{tpu_custom_call.1} parent=1 // pred_fallthru
      _
    // Predicated region
    $region14: #{tpu_custom_call.1} parent=1 // pred_check
      _
    $region15: #{tpu_custom_call.1} parent=1 // pred_check_branch
      %25 = sbr.rel (0) target = $region17
    $region16: #{tpu_custom_call.1} parent=1 // pred_region
      _
    $region17: #{tpu_custom_call.1} parent=1 // pred_fallthru
      _
    // Predicated region
    $region18: #{tpu_custom_call.1} parent=1 // pred_check
      _
    $region19: #{tpu_custom_call.1} parent=1 // pred_check_branch
      %27 = sbr.rel (0) target = $region21
    $region20: #{tpu_custom_call.1} parent=1 // pred_region
      _
    $region21: #{tpu_custom_call.1} parent=1 // pred_fallthru
      _
    // Predicated region
    $region22: #{tpu_custom_call.1} parent=1 // pred_check
      _
    $region23: #{tpu_custom_call.1} parent=1 // pred_check_branch
      %29 = sbr.rel (0) target = $region25
    $region24: #{tpu_custom_call.1} parent=1 // pred_region
      _
    $region25: #{tpu_custom_call.1} parent=1 // pred_fallthru
      _
    // Predicated region
    $region26: #{tpu_custom_call.1} parent=1 // pred_check
      _
    $region27: #{tpu_custom_call.1} parent=1 // pred_check_branch
      %31 = sbr.rel (0) target = $region29
    $region28: #{tpu_custom_call.1} parent=1 // pred_region
      _
    $region29: #{tpu_custom_call.1} parent=1 // pred_fallthru
      _
    // Predicated region
    $region30: #{tpu_custom_call.1} parent=1 // pred_check
      _
    $region31: #{tpu_custom_call.1} parent=1 // pred_check_branch
      %33 = sbr.rel (0) target = $region33
    $region32: #{tpu_custom_call.1} parent=1 // pred_region
      _
    $region33: #{tpu_custom_call.1} parent=1 // pred_fallthru
      _
    // Predicated region
    $region34: #{tpu_custom_call.1} parent=1 // pred_check
      _
    $region35: #{tpu_custom_call.1} parent=1 // pred_check_branch
      %35 = sbr.rel (0) target = $region37
    $region36: #{tpu_custom_call.1} parent=1 // pred_region
      _
    $region37: #{tpu_custom_call.1} parent=1 // pred_fallthru
      _
    // Predicated region
    $region38: #{tpu_custom_call.1} parent=1 // pred_check
      _
    $region39: #{tpu_custom_call.1} parent=1 // pred_check_branch
      %37 = sbr.rel (0) target = $region41
    $region40: #{tpu_custom_call.1} parent=1 // pred_region
      _
    $region41: #{tpu_custom_call.1} parent=1 // pred_fallthru
      _
    // Predicated region
    $region42: #{tpu_custom_call.1} parent=1 // pred_check
      _
    $region43: #{tpu_custom_call.1} parent=1 // pred_check_branch
      %39 = sbr.rel (0) target = $region45
    $region44: #{tpu_custom_call.1} parent=1 // pred_region
      _
    $region45: #{tpu_custom_call.1} parent=1 // pred_fallthru
      _
    %v41 = vld [vmem:[%s1] sm:$0xff]
    %v42 = vld [vmem:[%s1 + $0x8] sm:$0xff]
    %v43 = vld [vmem:[%s1 + $0x10] sm:$0xff]
    %v44 = vld [vmem:[%s1 + $0x18] sm:$0xff]
    %v45 = vld [vmem:[%s1 + $0x20] sm:$0xff]
    %v46 = vld [vmem:[%s1 + $0x28] sm:$0xff]
    %v47 = vld [vmem:[%s1 + $0x30] sm:$0xff]
    %v48 = vld [vmem:[%s1 + $0x38] sm:$0xff]
    %v49 = vld [vmem:[%s1 + $0x40] sm:$0xff]
    %v50 = vld [vmem:[%s1 + $0x48] sm:$0xff]
    %v51 = vld [vmem:[%s1 + $0x50] sm:$0xff]
    %v52 = vld [vmem:[%s1 + $0x58] sm:$0xff]
    %v53 = vld [vmem:[%s1 + $0x60] sm:$0xff]
    %v54 = vld [vmem:[%s1 + $0x68] sm:$0xff]
    %v55 = vld [vmem:[%s1 + $0x70] sm:$0xff]
    %v56 = vld [vmem:[%s1 + $0x78] sm:$0xff]
    %v57 = vand.u32 2147483647, %v41
    %v58 = vand.u32 2147483647, %v42
    %v59 = vand.u32 2147483647, %v43
    %v60 = vand.u32 2147483647, %v44
    %v61 = vand.u32 2147483647, %v45
    %v62 = vand.u32 2147483647, %v46
    %v63 = vand.u32 2147483647, %v47
    %v64 = vand.u32 2147483647, %v48
    %v65 = vand.u32 2147483647, %v49
    %v66 = vand.u32 2147483647, %v50
    %v67 = vand.u32 2147483647, %v51
    %v68 = vand.u32 2147483647, %v52
    %v69 = vand.u32 2147483647, %v53
    %v70 = vand.u32 2147483647, %v54
    %v71 = vand.u32 2147483647, %v55
    %v72 = vand.u32 2147483647, %v56
    %vm73 = vcmask 392192
    %v74 = vsel %vm73, %v57, -inf
    %v75 = vsel %vm73, %v58, -inf
    %v76 = vsel %vm73, %v59, -inf
    %v77 = vsel %vm73, %v60, -inf
    %v78 = vsel %vm73, %v61, -inf
    %v79 = vmax.f32 %v74, %v78
    %v80 = vsel %vm73, %v62, -inf
    %v81 = vmax.f32 %v75, %v80
    %v82 = vsel %vm73, %v63, -inf
    %v83 = vmax.f32 %v76, %v82
    %v84 = vsel %vm73, %v64, -inf
    %v85 = vmax.f32 %v77, %v84
    %v86 = vsel %vm73, %v65, -inf
    %v87 = vmax.f32 %v79, %v86
    %v88 = vsel %vm73, %v66, -inf
    %v89 = vmax.f32 %v81, %v88
    %v90 = vsel %vm73, %v67, -inf
    %v91 = vmax.f32 %v83, %v90
    %v92 = vsel %vm73, %v68, -inf
    %v93 = vmax.f32 %v85, %v92
    %v94 = vsel %vm73, %v69, -inf
    %v95 = vmax.f32 %v87, %v94
    %v96 = vsel %vm73, %v70, -inf
    %v97 = vmax.f32 %v89, %v96
    %v98 = vsel %vm73, %v71, -inf
    %v99 = vmax.f32 %v91, %v98
    %v100 = vsel %vm73, %v72, -inf
    %v101 = vmax.f32 %v93, %v100
    %v102 = vmax.f32 %v95, %v97
    %v103 = vmax.f32 %v99, %v101
    %v104 = vmax.f32 %v102, %v103
    %105 = vmax.xlane.f32.xlu0 %v104
    %v106 = vpop.xlane.xlu0 %105
    %v107 = vrot.slane %v106, 4
    %v108 = vmax.f32 %v106, %v107
    %v109 = vrot.slane %v108, 2
    %v110 = vmax.f32 %v108, %v109
    %v111 = vrot.slane %v110, 1
    %v112 = vmax.f32 %v110, %v111
    %s113 = vtos %v112
    %p114 = scmp.gt.f32.partialorder %s113, 0.0
    %v115 = vrcp.pop 127.0
    %s116 = vtos %v115
    %s117 = smul.f32 %s113, %s116
    %s118 = scalar_select %p114, %s117, 1.0
    %v119 = vstv %s118
    %v120 = vrcp.pop %v119
    %v121 = vmul.f32 %v41, %v120
    %v122 = vmul.f32 %v42, %v120
    %v123 = vmul.f32 %v43, %v120
    %v124 = vmul.f32 %v44, %v120
    %v125 = vmul.f32 %v45, %v120
    %v126 = vmul.f32 %v46, %v120
    %v127 = vmul.f32 %v47, %v120
    %v128 = vmul.f32 %v48, %v120
    %v129 = vmul.f32 %v49, %v120
    %v130 = vmul.f32 %v50, %v120
    %v131 = vmul.f32 %v51, %v120
    %v132 = vmul.f32 %v52, %v120
    %v133 = vmul.f32 %v53, %v120
    %v134 = vmul.f32 %v54, %v120
    %v135 = vmul.f32 %v55, %v120
    %v136 = vmul.f32 %v56, %v120
    %v137 = vround.ne.pseudo %v121
    %v138 = vround.ne.pseudo %v122
    %v139 = vround.ne.pseudo %v123
    %v140 = vround.ne.pseudo %v124
    %v141 = vround.ne.pseudo %v125
    %v142 = vround.ne.pseudo %v126
    %v143 = vround.ne.pseudo %v127
    %v144 = vround.ne.pseudo %v128
    %v145 = vround.ne.pseudo %v129
    %v146 = vround.ne.pseudo %v130
    %v147 = vround.ne.pseudo %v131
    %v148 = vround.ne.pseudo %v132
    %v149 = vround.ne.pseudo %v133
    %v150 = vround.ne.pseudo %v134
    %v151 = vround.ne.pseudo %v135
    %v152 = vround.ne.pseudo %v136
    %v153 = vmax.f32 %v137, -128.0
    %v154 = vmax.f32 %v138, -128.0
    %v155 = vmax.f32 %v139, -128.0
    %v156 = vmax.f32 %v140, -128.0
    %v157 = vmax.f32 %v141, -128.0
    %v158 = vmax.f32 %v142, -128.0
    %v159 = vmax.f32 %v143, -128.0
    %v160 = vmax.f32 %v144, -128.0
    %v161 = vmax.f32 %v145, -128.0
    %v162 = vmax.f32 %v146, -128.0
    %v163 = vmax.f32 %v147, -128.0
    %v164 = vmax.f32 %v148, -128.0
    %v165 = vmax.f32 %v149, -128.0
    %v166 = vmax.f32 %v150, -128.0
    %v167 = vmax.f32 %v151, -128.0
    %v168 = vmax.f32 %v152, -128.0
    %v169 = vmin.f32 %v153, 127.0
    %v170 = vmin.f32 %v154, 127.0
    %v171 = vmin.f32 %v155, 127.0
    %v172 = vmin.f32 %v156, 127.0
    %v173 = vmin.f32 %v157, 127.0
    %v174 = vmin.f32 %v158, 127.0
    %v175 = vmin.f32 %v159, 127.0
    %v176 = vmin.f32 %v160, 127.0
    %v177 = vmin.f32 %v161, 127.0
    %v178 = vmin.f32 %v162, 127.0
    %v179 = vmin.f32 %v163, 127.0
    %v180 = vmin.f32 %v164, 127.0
    %v181 = vmin.f32 %v165, 127.0
    %v182 = vmin.f32 %v166, 127.0
    %v183 = vmin.f32 %v167, 127.0
    %v184 = vmin.f32 %v168, 127.0
    %s185 = sld [smem:[#allocation2]]
    %s186 = scvt.s32.f32 %s185
    %s187 = ssub.f32 0.0, %s186
    %v188 = vstv %s187
    %v189 = vpow.pop %v188
    %s190 = vtos %v189
    %s191 = smul.f32 %s118, %s190
    %v192 = vld [vmem:[%s3] sm:$0x1]
    %v193 = vstv %s191
    %v194 = vmul.f32 %v193, %v192
    %v195 = vld [vmem:[%s4] sm:$0x1]
    %v196 = vrcp.pop %v194
    %v197 = vmul.f32 %v195, %v196
    %v198 = vround.ne.pseudo %v197
    %v199 = vpack.c.bf16 %v170, %v169
    %v200 = vpack.c.bf16 %v172, %v171
    %v201 = vpack.c.bf16 %v174, %v173
    %v202 = vpack.c.bf16 %v176, %v175
    %v203 = vpack.c.bf16 %v178, %v177
    %v204 = vpack.c.bf16 %v180, %v179
    %v205 = vpack.c.bf16 %v182, %v181
    %v206 = vpack.c.bf16 %v184, %v183
    %v207 = vld [vmem:[%s2] sm:$0xf]
    %v208 = vld [vmem:[%s2 + $0x4] sm:$0xf]
    %v209 = vld [vmem:[%s2 + $0x8] sm:$0xf]
    %v210 = vld [vmem:[%s2 + $0xc] sm:$0xf]
    %v211 = vld [vmem:[%s2 + $0x10] sm:$0xf]
    %v212 = vld [vmem:[%s2 + $0x14] sm:$0xf]
    %v214 = vlaneseq
    %v215 = vshrl.u32 %v214, 7
    %v216 = vsub.s32 0, %v215
    %v217 = vrot.slane %v198, %v216
    %v225 = vunpack.c.l.b16 %v207
    %v226 = vunpack.c.l.b16 %v208
    %v227 = vunpack.c.l.b16 %v209
    %v228 = vunpack.c.l.b16 %v210
    %v229 = vunpack.c.l.b16 %v211
    %v230 = vunpack.c.l.b16 %v212
    %v231 = vpack.c.b16 %v226, %v225
    %v232 = vpack.c.b16 %v228, %v227
    %v233 = vpack.c.b16 %v230, %v229
    %v238 = vsel %vm73, %v199, 0
    %v241 = vsel %vm73, %v200, 0
    %v244 = vsel %vm73, %v201, 0
    %v247 = vsel %vm73, %v202, 0
    %v250 = vsel %vm73, %v203, 0
    %v253 = vsel %vm73, %v204, 0
    %v256 = vsel %vm73, %v205, 0
    %v259 = vsel %vm73, %v206, 0
    %261 = vmatprep.subr.bf16.mxu0 0
    %262 = vmatpush1.bf16.msra.mxu0 0
    %263 = vmatprep.subr.bf16.mxu0 0
    %264 = vmatpush1.bf16.msra.mxu0 0
    %265 = vmatprep.subr.bf16.mxu0 0
    %266 = vmatpush1.bf16.msra.mxu0 0
    %267 = vmatprep.subr.bf16.mxu0 0
    %268 = vmatpush1.bf16.msra.mxu0 0
    %269 = vmatprep.subr.bf16.mxu0 0
    %270 = vmatpush1.bf16.msra.mxu0 0
    %271 = vmatprep.subr.bf16.mxu0 0
    %272 = vmatpush1.bf16.msra.mxu0 %v233
    %273 = vmatprep.subr.bf16.mxu0 0
    %274 = vmatpush1.bf16.msra.mxu0 %v232
    %275 = vmatprep.subr.bf16.mxu0 0
    %276 = vmatpush1.bf16.msra.mxu0 %v231
    %277 = vmatprep.subr.bf16.mxu0 0
    %278 = vmatpush2.bf16.msra.mxu0 0
    %279 = vmatprep.subr.bf16.mxu0 0
    %280 = vmatpush2.bf16.msra.mxu0 0
    %281 = vmatprep.subr.bf16.mxu0 0
    %282 = vmatpush2.bf16.msra.mxu0 0
    %283 = vmatprep.subr.bf16.mxu0 0
    %284 = vmatpush2.bf16.msra.mxu0 0
    %285 = vmatprep.subr.bf16.mxu0 0
    %286 = vmatpush2.bf16.msra.mxu0 0
    %287 = vmatprep.subr.bf16.mxu0 0
    %288 = vmatpush2.bf16.msra.mxu0 0
    %289 = vmatprep.subr.bf16.mxu0 0
    %290 = vmatpush2.bf16.msra.mxu0 0
    %291 = vmatprep.subr.bf16.mxu0 0
    %292 = vmatpush2.bf16.msra.mxu0 0
    %293 = vmatprep.mubr.bf16.mxu0 0
    %294 = vmatmul.mubr.bf16.gmra.mxu0 %v238
    %v295 = vpop.f32.mrf.mxu0
    %v296 = vadd.f32 %v217, %v295
    %v297 = vpop.f32.mrf.mxu0
    %v298 = vpop.f32.mrf.mxu0
    %v299 = vadd.f32 %v217, %v298
    %v300 = vpop.f32.mrf.mxu0
    %301 = vmatprep.mubr.bf16.mxu0 0
    %302 = vmatmul.mubr.bf16.gmra.mxu0 %v241
    %v303 = vpop.f32.mrf.mxu0
    %v304 = vadd.f32 %v217, %v303
    %v305 = vpop.f32.mrf.mxu0
    %v306 = vpop.f32.mrf.mxu0
    %v307 = vadd.f32 %v217, %v306
    %v308 = vpop.f32.mrf.mxu0
    %309 = vmatprep.mubr.bf16.mxu0 0
    %310 = vmatmul.mubr.bf16.gmra.mxu0 %v244
    %v311 = vpop.f32.mrf.mxu0
    %v312 = vadd.f32 %v217, %v311
    %v313 = vpop.f32.mrf.mxu0
    %v314 = vpop.f32.mrf.mxu0
    %v315 = vadd.f32 %v217, %v314
    %v316 = vpop.f32.mrf.mxu0
    %317 = vmatprep.mubr.bf16.mxu0 0
    %318 = vmatmul.mubr.bf16.gmra.mxu0 %v247
    %v319 = vpop.f32.mrf.mxu0
    %v320 = vadd.f32 %v217, %v319
    %v321 = vpop.f32.mrf.mxu0
    %v322 = vpop.f32.mrf.mxu0
    %v323 = vadd.f32 %v217, %v322
    %v324 = vpop.f32.mrf.mxu0
    %325 = vmatprep.mubr.bf16.mxu0 0
    %326 = vmatmul.mubr.bf16.gmra.mxu0 %v250
    %v327 = vpop.f32.mrf.mxu0
    %v328 = vadd.f32 %v217, %v327
    %v329 = vpop.f32.mrf.mxu0
    %v330 = vpop.f32.mrf.mxu0
    %v331 = vadd.f32 %v217, %v330
    %v332 = vpop.f32.mrf.mxu0
    %333 = vmatprep.mubr.bf16.mxu0 0
    %334 = vmatmul.mubr.bf16.gmra.mxu0 %v253
    %v335 = vpop.f32.mrf.mxu0
    %v336 = vadd.f32 %v217, %v335
    %v337 = vpop.f32.mrf.mxu0
    %v338 = vpop.f32.mrf.mxu0
    %v339 = vadd.f32 %v217, %v338
    %v340 = vpop.f32.mrf.mxu0
    %341 = vmatprep.mubr.bf16.mxu0 0
    %342 = vmatmul.mubr.bf16.gmra.mxu0 %v256
    %v343 = vpop.f32.mrf.mxu0
    %v344 = vadd.f32 %v217, %v343
    %v345 = vpop.f32.mrf.mxu0
    %v346 = vpop.f32.mrf.mxu0
    %v347 = vadd.f32 %v217, %v346
    %v348 = vpop.f32.mrf.mxu0
    %349 = vmatprep.mubr.bf16.mxu0 0
    %350 = vmatmul.mubr.bf16.gmra.mxu0 %v259
    %v351 = vpop.f32.mrf.mxu0
    %v352 = vadd.f32 %v217, %v351
    %v353 = vpop.f32.mrf.mxu0
    %v354 = vpop.f32.mrf.mxu0
    %v355 = vadd.f32 %v217, %v354
    %v356 = vpop.f32.mrf.mxu0
    %357 = vdwg.mxu0
    %vm358 = vcmask 326656
    %v359 = vsel %vm358, %v296, -inf
    %v360 = vsel %vm358, %v299, -inf
    %v361 = vsel %vm358, %v304, -inf
    %v362 = vsel %vm358, %v307, -inf
    %v363 = vsel %vm358, %v312, -inf
    %v364 = vmax.f32 %v359, %v363
    %v365 = vsel %vm358, %v315, -inf
    %v366 = vmax.f32 %v360, %v365
    %v367 = vsel %vm358, %v320, -inf
    %v368 = vmax.f32 %v361, %v367
    %v369 = vsel %vm358, %v323, -inf
    %v370 = vmax.f32 %v362, %v369
    %v371 = vsel %vm358, %v328, -inf
    %v372 = vmax.f32 %v364, %v371
    %v373 = vsel %vm358, %v331, -inf
    %v374 = vmax.f32 %v366, %v373
    %v375 = vsel %vm358, %v336, -inf
    %v376 = vmax.f32 %v368, %v375
    %v377 = vsel %vm358, %v339, -inf
    %v378 = vmax.f32 %v370, %v377
    %v379 = vsel %vm358, %v344, -inf
    %v380 = vmax.f32 %v372, %v379
    %v381 = vsel %vm358, %v347, -inf
    %v382 = vmax.f32 %v374, %v381
    %v383 = vsel %vm358, %v352, -inf
    %v384 = vmax.f32 %v376, %v383
    %v385 = vsel %vm358, %v355, -inf
    %v386 = vmax.f32 %v378, %v385
    %v387 = vmax.f32 %v380, %v382
    %v388 = vmax.f32 %v384, %v386
    %v389 = vmax.f32 %v387, %v388
    %v390 = vrot.slane %v389, 4
    %v391 = vmax.f32 %v389, %v390
    %v392 = vrot.slane %v391, 2
    %v393 = vmax.f32 %v391, %v392
    %v394 = vrot.slane %v393, 1
    %v395 = vmax.f32 %v393, %v394
    %v396 = vmul.f32 %v395, %v194
    %vm397 = vcmask 319488
    %v398 = vsel %vm397, %v396, -inf
    %399 = vmax.xlane.f32.xlu0 %v398
    %v400 = vpop.xlane.xlu0 %399
    %v401 = vrot.slane %v400, 4
    %v402 = vmax.f32 %v400, %v401
    %v403 = vrot.slane %v402, 2
    %v404 = vmax.f32 %v402, %v403
    %v405 = vrot.slane %v404, 1
    %v406 = vmax.f32 %v404, %v405
    %s407 = vtos %v406
    %s408 = smax.f32 %s407, 0.0
    %p409 = scmp.gt.f32.partialorder %s408, 0.0
    %v410 = vrcp.pop 255.0
    %s411 = vtos %v410
    %s412 = smul.f32 %s408, %s411
    %s413 = scalar_select %p409, %s412, 1.0
    %v414 = vstv %s413
    %v415 = vrcp.pop %v414
    %v416 = vmul.f32 %v194, %v415
    %v418 = vlaneseq
    %v419 = vshrl.u32 %v418, 7
    %v420 = vsub.s32 0, %v419
    %v421 = vrot.slane %v416, %v420
    %v423 = vmul.f32 %v296, %v421
    %v424 = vmul.f32 %v299, %v421
    %v425 = vmul.f32 %v304, %v421
    %v426 = vmul.f32 %v307, %v421
    %v427 = vmul.f32 %v312, %v421
    %v428 = vmul.f32 %v315, %v421
    %v429 = vmul.f32 %v320, %v421
    %v430 = vmul.f32 %v323, %v421
    %v431 = vmul.f32 %v328, %v421
    %v432 = vmul.f32 %v331, %v421
    %v433 = vmul.f32 %v336, %v421
    %v434 = vmul.f32 %v339, %v421
    %v435 = vmul.f32 %v344, %v421
    %v436 = vmul.f32 %v347, %v421
    %v437 = vmul.f32 %v352, %v421
    %v438 = vmul.f32 %v355, %v421
    %v439 = vround.ne.pseudo %v423
    %v440 = vround.ne.pseudo %v424
    %v441 = vround.ne.pseudo %v425
    %v442 = vround.ne.pseudo %v426
    %v443 = vround.ne.pseudo %v427
    %v444 = vround.ne.pseudo %v428
    %v445 = vround.ne.pseudo %v429
    %v446 = vround.ne.pseudo %v430
    %v447 = vround.ne.pseudo %v431
    %v448 = vround.ne.pseudo %v432
    %v449 = vround.ne.pseudo %v433
    %v450 = vround.ne.pseudo %v434
    %v451 = vround.ne.pseudo %v435
    %v452 = vround.ne.pseudo %v436
    %v453 = vround.ne.pseudo %v437
    %v454 = vround.ne.pseudo %v438
    %v455 = vmax.f32 %v439, 0.0
    %v456 = vmax.f32 %v440, 0.0
    %v457 = vmax.f32 %v441, 0.0
    %v458 = vmax.f32 %v442, 0.0
    %v459 = vmax.f32 %v443, 0.0
    %v460 = vmax.f32 %v444, 0.0
    %v461 = vmax.f32 %v445, 0.0
    %v462 = vmax.f32 %v446, 0.0
    %v463 = vmax.f32 %v447, 0.0
    %v464 = vmax.f32 %v448, 0.0
    %v465 = vmax.f32 %v449, 0.0
    %v466 = vmax.f32 %v450, 0.0
    %v467 = vmax.f32 %v451, 0.0
    %v468 = vmax.f32 %v452, 0.0
    %v469 = vmax.f32 %v453, 0.0
    %v470 = vmax.f32 %v454, 0.0
    %v471 = vmin.f32 %v455, 255.0
    %v472 = vmin.f32 %v456, 255.0
    %v473 = vmin.f32 %v457, 255.0
    %v474 = vmin.f32 %v458, 255.0
    %v475 = vmin.f32 %v459, 255.0
    %v476 = vmin.f32 %v460, 255.0
    %v477 = vmin.f32 %v461, 255.0
    %v478 = vmin.f32 %v462, 255.0
    %v479 = vmin.f32 %v463, 255.0
    %v480 = vmin.f32 %v464, 255.0
    %v481 = vmin.f32 %v465, 255.0
    %v482 = vmin.f32 %v466, 255.0
    %v483 = vmin.f32 %v467, 255.0
    %v484 = vmin.f32 %v468, 255.0
    %v485 = vmin.f32 %v469, 255.0
    %v486 = vmin.f32 %v470, 255.0
    %v487 = vld [vmem:[%s6] sm:$0x1]
    %v488 = vmul.f32 %v414, %v487
    %v489 = vld [vmem:[%s7] sm:$0x1]
    %v490 = vrcp.pop %v488
    %v491 = vmul.f32 %v489, %v490
    %v492 = vround.ne.pseudo %v491
    %v493 = vpack.c.bf16 %v472, %v471
    %v494 = vpack.c.bf16 %v474, %v473
    %v495 = vpack.c.bf16 %v476, %v475
    %v496 = vpack.c.bf16 %v478, %v477
    %v497 = vpack.c.bf16 %v480, %v479
    %v498 = vpack.c.bf16 %v482, %v481
    %v499 = vpack.c.bf16 %v484, %v483
    %v500 = vpack.c.bf16 %v486, %v485
    %v501 = vld [vmem:[%s5] sm:$0xf]
    %v502 = vld [vmem:[%s5 + $0x4] sm:$0xf]
    %v503 = vld [vmem:[%s5 + $0x8] sm:$0xf]
    %v504 = vld [vmem:[%s5 + $0xc] sm:$0xf]
    %v505 = vld [vmem:[%s5 + $0x10] sm:$0xf]
    %v507 = vlaneseq
    %v508 = vshrl.u32 %v507, 7
    %v509 = vsub.s32 0, %v508
    %v510 = vrot.slane %v492, %v509
    %v517 = vunpack.c.l.b16 %v501
    %v518 = vunpack.c.l.b16 %v502
    %v519 = vunpack.c.l.b16 %v503
    %v520 = vunpack.c.l.b16 %v504
    %v521 = vunpack.c.l.b16 %v505
    %v522 = vpack.c.b16 %v518, %v517
    %v523 = vpack.c.b16 %v520, %v519
    %v524 = vpack.c.b16 %v521, %v521
    %v528 = vsel %vm358, %v493, 0
    %v531 = vsel %vm358, %v494, 0
    %v534 = vsel %vm358, %v495, 0
    %v537 = vsel %vm358, %v496, 0
    %v540 = vsel %vm358, %v497, 0
    %v543 = vsel %vm358, %v498, 0
    %v546 = vsel %vm358, %v499, 0
    %v549 = vsel %vm358, %v500, 0
    %vm551 = vcmask 1043456
    %v553 = vsel %vm551, %v524, 0
    %555 = vmatprep.subr.bf16.mxu0 0
    %556 = vmatpush1.bf16.msra.mxu0 0
    %557 = vmatprep.subr.bf16.mxu0 0
    %558 = vmatpush1.bf16.msra.mxu0 0
    %559 = vmatprep.subr.bf16.mxu0 0
    %560 = vmatpush1.bf16.msra.mxu0 0
    %561 = vmatprep.subr.bf16.mxu0 0
    %562 = vmatpush1.bf16.msra.mxu0 0
    %563 = vmatprep.subr.bf16.mxu0 0
    %564 = vmatpush1.bf16.msra.mxu0 0
    %565 = vmatprep.subr.bf16.mxu0 0
    %566 = vmatpush1.bf16.msra.mxu0 %v553
    %567 = vmatprep.subr.bf16.mxu0 0
    %568 = vmatpush1.bf16.msra.mxu0 %v523
    %569 = vmatprep.subr.bf16.mxu0 0
    %570 = vmatpush1.bf16.msra.mxu0 %v522
    %571 = vmatprep.subr.bf16.mxu0 0
    %572 = vmatpush2.bf16.msra.mxu0 0
    %573 = vmatprep.subr.bf16.mxu0 0
    %574 = vmatpush2.bf16.msra.mxu0 0
    %575 = vmatprep.subr.bf16.mxu0 0
    %576 = vmatpush2.bf16.msra.mxu0 0
    %577 = vmatprep.subr.bf16.mxu0 0
    %578 = vmatpush2.bf16.msra.mxu0 0
    %579 = vmatprep.subr.bf16.mxu0 0
    %580 = vmatpush2.bf16.msra.mxu0 0
    %581 = vmatprep.subr.bf16.mxu0 0
    %582 = vmatpush2.bf16.msra.mxu0 0
    %583 = vmatprep.subr.bf16.mxu0 0
    %584 = vmatpush2.bf16.msra.mxu0 0
    %585 = vmatprep.subr.bf16.mxu0 0
    %586 = vmatpush2.bf16.msra.mxu0 0
    %587 = vmatprep.mubr.bf16.mxu0 0
    %588 = vmatmul.mubr.bf16.gmra.mxu0 %v528
    %v589 = vpop.f32.mrf.mxu0
    %v590 = vadd.f32 %v510, %v589
    %v591 = vpop.f32.mrf.mxu0
    %v592 = vpop.f32.mrf.mxu0
    %v593 = vadd.f32 %v510, %v592
    %v594 = vpop.f32.mrf.mxu0
    %595 = vmatprep.mubr.bf16.mxu0 0
    %596 = vmatmul.mubr.bf16.gmra.mxu0 %v531
    %v597 = vpop.f32.mrf.mxu0
    %v598 = vadd.f32 %v510, %v597
    %v599 = vpop.f32.mrf.mxu0
    %v600 = vpop.f32.mrf.mxu0
    %v601 = vadd.f32 %v510, %v600
    %v602 = vpop.f32.mrf.mxu0
    %603 = vmatprep.mubr.bf16.mxu0 0
    %604 = vmatmul.mubr.bf16.gmra.mxu0 %v534
    %v605 = vpop.f32.mrf.mxu0
    %v606 = vadd.f32 %v510, %v605
    %v607 = vpop.f32.mrf.mxu0
    %v608 = vpop.f32.mrf.mxu0
    %v609 = vadd.f32 %v510, %v608
    %v610 = vpop.f32.mrf.mxu0
    %611 = vmatprep.mubr.bf16.mxu0 0
    %612 = vmatmul.mubr.bf16.gmra.mxu0 %v537
    %v613 = vpop.f32.mrf.mxu0
    %v614 = vadd.f32 %v510, %v613
    %v615 = vpop.f32.mrf.mxu0
    %v616 = vpop.f32.mrf.mxu0
    %v617 = vadd.f32 %v510, %v616
    %v618 = vpop.f32.mrf.mxu0
    %619 = vmatprep.mubr.bf16.mxu0 0
    %620 = vmatmul.mubr.bf16.gmra.mxu0 %v540
    %v621 = vpop.f32.mrf.mxu0
    %v622 = vadd.f32 %v510, %v621
    %v623 = vpop.f32.mrf.mxu0
    %v624 = vpop.f32.mrf.mxu0
    %v625 = vadd.f32 %v510, %v624
    %v626 = vpop.f32.mrf.mxu0
    %627 = vmatprep.mubr.bf16.mxu0 0
    %628 = vmatmul.mubr.bf16.gmra.mxu0 %v543
    %v629 = vpop.f32.mrf.mxu0
    %v630 = vadd.f32 %v510, %v629
    %v631 = vpop.f32.mrf.mxu0
    %v632 = vpop.f32.mrf.mxu0
    %v633 = vadd.f32 %v510, %v632
    %v634 = vpop.f32.mrf.mxu0
    %635 = vmatprep.mubr.bf16.mxu0 0
    %636 = vmatmul.mubr.bf16.gmra.mxu0 %v546
    %v637 = vpop.f32.mrf.mxu0
    %v638 = vadd.f32 %v510, %v637
    %v639 = vpop.f32.mrf.mxu0
    %v640 = vpop.f32.mrf.mxu0
    %v641 = vadd.f32 %v510, %v640
    %v642 = vpop.f32.mrf.mxu0
    %643 = vmatprep.mubr.bf16.mxu0 0
    %644 = vmatmul.mubr.bf16.gmra.mxu0 %v549
    %v645 = vpop.f32.mrf.mxu0
    %v646 = vadd.f32 %v510, %v645
    %v647 = vpop.f32.mrf.mxu0
    %v648 = vpop.f32.mrf.mxu0
    %v649 = vadd.f32 %v510, %v648
    %v650 = vpop.f32.mrf.mxu0
    %651 = vdwg.mxu0
    %vm652 = vcmask 261120
    %v653 = vsel %vm652, %v590, -inf
    %v654 = vsel %vm652, %v593, -inf
    %v655 = vsel %vm652, %v598, -inf
    %v656 = vsel %vm652, %v601, -inf
    %v657 = vsel %vm652, %v606, -inf
    %v658 = vmax.f32 %v653, %v657
    %v659 = vsel %vm652, %v609, -inf
    %v660 = vmax.f32 %v654, %v659
    %v661 = vsel %vm652, %v614, -inf
    %v662 = vmax.f32 %v655, %v661
    %v663 = vsel %vm652, %v617, -inf
    %v664 = vmax.f32 %v656, %v663
    %v665 = vsel %vm652, %v622, -inf
    %v666 = vmax.f32 %v658, %v665
    %v667 = vsel %vm652, %v625, -inf
    %v668 = vmax.f32 %v660, %v667
    %v669 = vsel %vm652, %v630, -inf
    %v670 = vmax.f32 %v662, %v669
    %v671 = vsel %vm652, %v633, -inf
    %v672 = vmax.f32 %v664, %v671
    %v673 = vsel %vm652, %v638, -inf
    %v674 = vmax.f32 %v666, %v673
    %v675 = vsel %vm652, %v641, -inf
    %v676 = vmax.f32 %v668, %v675
    %v677 = vsel %vm652, %v646, -inf
    %v678 = vmax.f32 %v670, %v677
    %v679 = vsel %vm652, %v649, -inf
    %v680 = vmax.f32 %v672, %v679
    %v681 = vmax.f32 %v674, %v676
    %v682 = vmax.f32 %v678, %v680
    %v683 = vmax.f32 %v681, %v682
    %v684 = vrot.slane %v683, 4
    %v685 = vmax.f32 %v683, %v684
    %v686 = vrot.slane %v685, 2
    %v687 = vmax.f32 %v685, %v686
    %v688 = vrot.slane %v687, 1
    %v689 = vmax.f32 %v687, %v688
    %v690 = vmul.f32 %v689, %v488
    %vm691 = vcmask 253952
    %v692 = vsel %vm691, %v690, -inf
    %693 = vmax.xlane.f32.xlu0 %v692
    %v694 = vpop.xlane.xlu0 %693
    %v695 = vrot.slane %v694, 4
    %v696 = vmax.f32 %v694, %v695
    %v697 = vrot.slane %v696, 2
    %v698 = vmax.f32 %v696, %v697
    %v699 = vrot.slane %v698, 1
    %v700 = vmax.f32 %v698, %v699
    %s701 = vtos %v700
    %s702 = smax.f32 %s701, 0.0
    %p703 = scmp.gt.f32.partialorder %s702, 0.0
    %v704 = vrcp.pop 255.0
    %s705 = vtos %v704
    %s706 = smul.f32 %s702, %s705
    %s707 = scalar_select %p703, %s706, 1.0
    %v708 = vstv %s707
    %v709 = vrcp.pop %v708
    %v710 = vmul.f32 %v488, %v709
    %v712 = vlaneseq
    %v713 = vshrl.u32 %v712, 7
    %v714 = vsub.s32 0, %v713
    %v715 = vrot.slane %v710, %v714
    %v717 = vmul.f32 %v590, %v715
    %v718 = vmul.f32 %v593, %v715
    %v719 = vmul.f32 %v598, %v715
    %v720 = vmul.f32 %v601, %v715
    %v721 = vmul.f32 %v606, %v715
    %v722 = vmul.f32 %v609, %v715
    %v723 = vmul.f32 %v614, %v715
    %v724 = vmul.f32 %v617, %v715
    %v725 = vmul.f32 %v622, %v715
    %v726 = vmul.f32 %v625, %v715
    %v727 = vmul.f32 %v630, %v715
    %v728 = vmul.f32 %v633, %v715
    %v729 = vmul.f32 %v638, %v715
    %v730 = vmul.f32 %v641, %v715
    %v731 = vmul.f32 %v646, %v715
    %v732 = vmul.f32 %v649, %v715
    %v733 = vround.ne.pseudo %v717
    %v734 = vround.ne.pseudo %v718
    %v735 = vround.ne.pseudo %v719
    %v736 = vround.ne.pseudo %v720
    %v737 = vround.ne.pseudo %v721
    %v738 = vround.ne.pseudo %v722
    %v739 = vround.ne.pseudo %v723
    %v740 = vround.ne.pseudo %v724
    %v741 = vround.ne.pseudo %v725
    %v742 = vround.ne.pseudo %v726
    %v743 = vround.ne.pseudo %v727
    %v744 = vround.ne.pseudo %v728
    %v745 = vround.ne.pseudo %v729
    %v746 = vround.ne.pseudo %v730
    %v747 = vround.ne.pseudo %v731
    %v748 = vround.ne.pseudo %v732
    %v749 = vmax.f32 %v733, 0.0
    %v750 = vmax.f32 %v734, 0.0
    %v751 = vmax.f32 %v735, 0.0
    %v752 = vmax.f32 %v736, 0.0
    %v753 = vmax.f32 %v737, 0.0
    %v754 = vmax.f32 %v738, 0.0
    %v755 = vmax.f32 %v739, 0.0
    %v756 = vmax.f32 %v740, 0.0
    %v757 = vmax.f32 %v741, 0.0
    %v758 = vmax.f32 %v742, 0.0
    %v759 = vmax.f32 %v743, 0.0
    %v760 = vmax.f32 %v744, 0.0
    %v761 = vmax.f32 %v745, 0.0
    %v762 = vmax.f32 %v746, 0.0
    %v763 = vmax.f32 %v747, 0.0
    %v764 = vmax.f32 %v748, 0.0
    %v765 = vmin.f32 %v749, 255.0
    %v766 = vmin.f32 %v750, 255.0
    %v767 = vmin.f32 %v751, 255.0
    %v768 = vmin.f32 %v752, 255.0
    %v769 = vmin.f32 %v753, 255.0
    %v770 = vmin.f32 %v754, 255.0
    %v771 = vmin.f32 %v755, 255.0
    %v772 = vmin.f32 %v756, 255.0
    %v773 = vmin.f32 %v757, 255.0
    %v774 = vmin.f32 %v758, 255.0
    %v775 = vmin.f32 %v759, 255.0
    %v776 = vmin.f32 %v760, 255.0
    %v777 = vmin.f32 %v761, 255.0
    %v778 = vmin.f32 %v762, 255.0
    %v779 = vmin.f32 %v763, 255.0
    %v780 = vmin.f32 %v764, 255.0
    %v781 = vld [vmem:[%s9] sm:$0x1]
    %v782 = vmul.f32 %v708, %v781
    %v783 = vld [vmem:[%s10] sm:$0x1]
    %v784 = vrcp.pop %v782
    %v785 = vmul.f32 %v783, %v784
    %v786 = vround.ne.pseudo %v785
    %v787 = vpack.c.bf16 %v766, %v765
    %v788 = vpack.c.bf16 %v768, %v767
    %v789 = vpack.c.bf16 %v770, %v769
    %v790 = vpack.c.bf16 %v772, %v771
    %v791 = vpack.c.bf16 %v774, %v773
    %v792 = vpack.c.bf16 %v776, %v775
    %v793 = vpack.c.bf16 %v778, %v777
    %v794 = vpack.c.bf16 %v780, %v779
    %v795 = vld [vmem:[%s8] sm:$0xf]
    %v796 = vld [vmem:[%s8 + $0x4] sm:$0xf]
    %v797 = vld [vmem:[%s8 + $0x8] sm:$0xf]
    %v798 = vld [vmem:[%s8 + $0xc] sm:$0xf]
    %v800 = vlaneseq
    %v801 = vshrl.u32 %v800, 7
    %v802 = vsub.s32 0, %v801
    %v803 = vrot.slane %v786, %v802
    %v809 = vunpack.c.l.b16 %v795
    %v810 = vunpack.c.l.b16 %v796
    %v811 = vunpack.c.l.b16 %v797
    %v812 = vunpack.c.l.b16 %v798
    %v813 = vpack.c.b16 %v810, %v809
    %v814 = vpack.c.b16 %v812, %v811
    %v818 = vsel %vm652, %v787, 0
    %v821 = vsel %vm652, %v788, 0
    %v824 = vsel %vm652, %v789, 0
    %v827 = vsel %vm652, %v790, 0
    %v830 = vsel %vm652, %v791, 0
    %v833 = vsel %vm652, %v792, 0
    %v836 = vsel %vm652, %v793, 0
    %v839 = vsel %vm652, %v794, 0
    %841 = vmatprep.subr.bf16.mxu0 0
    %842 = vmatpush1.bf16.msra.mxu0 0
    %843 = vmatprep.subr.bf16.mxu0 0
    %844 = vmatpush1.bf16.msra.mxu0 0
    %845 = vmatprep.subr.bf16.mxu0 0
    %846 = vmatpush1.bf16.msra.mxu0 0
    %847 = vmatprep.subr.bf16.mxu0 0
    %848 = vmatpush1.bf16.msra.mxu0 0
    %849 = vmatprep.subr.bf16.mxu0 0
    %850 = vmatpush1.bf16.msra.mxu0 0
    %851 = vmatprep.subr.bf16.mxu0 0
    %852 = vmatpush1.bf16.msra.mxu0 0
    %853 = vmatprep.subr.bf16.mxu0 0
    %854 = vmatpush1.bf16.msra.mxu0 %v814
    %855 = vmatprep.subr.bf16.mxu0 0
    %856 = vmatpush1.bf16.msra.mxu0 %v813
    %857 = vmatprep.subr.bf16.mxu0 0
    %858 = vmatpush2.bf16.msra.mxu0 0
    %859 = vmatprep.subr.bf16.mxu0 0
    %860 = vmatpush2.bf16.msra.mxu0 0
    %861 = vmatprep.subr.bf16.mxu0 0
    %862 = vmatpush2.bf16.msra.mxu0 0
    %863 = vmatprep.subr.bf16.mxu0 0
    %864 = vmatpush2.bf16.msra.mxu0 0
    %865 = vmatprep.subr.bf16.mxu0 0
    %866 = vmatpush2.bf16.msra.mxu0 0
    %867 = vmatprep.subr.bf16.mxu0 0
    %868 = vmatpush2.bf16.msra.mxu0 0
    %869 = vmatprep.subr.bf16.mxu0 0
    %870 = vmatpush2.bf16.msra.mxu0 0
    %871 = vmatprep.subr.bf16.mxu0 0
    %872 = vmatpush2.bf16.msra.mxu0 0
    %873 = vmatprep.mubr.bf16.mxu0 0
    %874 = vmatmul.mubr.bf16.gmra.mxu0 %v818
    %v875 = vpop.f32.mrf.mxu0
    %v876 = vadd.f32 %v803, %v875
    %v877 = vpop.f32.mrf.mxu0
    %v878 = vpop.f32.mrf.mxu0
    %v879 = vadd.f32 %v803, %v878
    %v880 = vpop.f32.mrf.mxu0
    %881 = vmatprep.mubr.bf16.mxu0 0
    %882 = vmatmul.mubr.bf16.gmra.mxu0 %v821
    %v883 = vpop.f32.mrf.mxu0
    %v884 = vadd.f32 %v803, %v883
    %v885 = vpop.f32.mrf.mxu0
    %v886 = vpop.f32.mrf.mxu0
    %v887 = vadd.f32 %v803, %v886
    %v888 = vpop.f32.mrf.mxu0
    %889 = vmatprep.mubr.bf16.mxu0 0
    %890 = vmatmul.mubr.bf16.gmra.mxu0 %v824
    %v891 = vpop.f32.mrf.mxu0
    %v892 = vadd.f32 %v803, %v891
    %v893 = vpop.f32.mrf.mxu0
    %v894 = vpop.f32.mrf.mxu0
    %v895 = vadd.f32 %v803, %v894
    %v896 = vpop.f32.mrf.mxu0
    %897 = vmatprep.mubr.bf16.mxu0 0
    %898 = vmatmul.mubr.bf16.gmra.mxu0 %v827
    %v899 = vpop.f32.mrf.mxu0
    %v900 = vadd.f32 %v803, %v899
    %v901 = vpop.f32.mrf.mxu0
    %v902 = vpop.f32.mrf.mxu0
    %v903 = vadd.f32 %v803, %v902
    %v904 = vpop.f32.mrf.mxu0
    %905 = vmatprep.mubr.bf16.mxu0 0
    %906 = vmatmul.mubr.bf16.gmra.mxu0 %v830
    %v907 = vpop.f32.mrf.mxu0
    %v908 = vadd.f32 %v803, %v907
    %v909 = vpop.f32.mrf.mxu0
    %v910 = vpop.f32.mrf.mxu0
    %v911 = vadd.f32 %v803, %v910
    %v912 = vpop.f32.mrf.mxu0
    %913 = vmatprep.mubr.bf16.mxu0 0
    %914 = vmatmul.mubr.bf16.gmra.mxu0 %v833
    %v915 = vpop.f32.mrf.mxu0
    %v916 = vadd.f32 %v803, %v915
    %v917 = vpop.f32.mrf.mxu0
    %v918 = vpop.f32.mrf.mxu0
    %v919 = vadd.f32 %v803, %v918
    %v920 = vpop.f32.mrf.mxu0
    %921 = vmatprep.mubr.bf16.mxu0 0
    %922 = vmatmul.mubr.bf16.gmra.mxu0 %v836
    %v923 = vpop.f32.mrf.mxu0
    %v924 = vadd.f32 %v803, %v923
    %v925 = vpop.f32.mrf.mxu0
    %v926 = vpop.f32.mrf.mxu0
    %v927 = vadd.f32 %v803, %v926
    %v928 = vpop.f32.mrf.mxu0
    %929 = vmatprep.mubr.bf16.mxu0 0
    %930 = vmatmul.mubr.bf16.gmra.mxu0 %v839
    %v931 = vpop.f32.mrf.mxu0
    %v932 = vadd.f32 %v803, %v931
    %v933 = vpop.f32.mrf.mxu0
    %v934 = vpop.f32.mrf.mxu0
    %v935 = vadd.f32 %v803, %v934
    %v936 = vpop.f32.mrf.mxu0
    %937 = vdwg.mxu0
    %v938 = vlog2.pop %v782
    %v939 = vmul.f32 %v938, 0.6931472
    %v940 = vrcp.pop 0.6931472
    %v941 = vmul.f32 %v939, %v940
    %v942 = vfloor.f32 %v941
    %v943 = vadd.f32 %v942, 1.0
    %v944 = vsub.f32 0.0, %v943
    %v945 = vpow.pop %v944
    %v946 = vmul.f32 %v782, %v945
    %v947 = vmul.f32 %v946, 2.1474836e+09
    %v948 = vround.ne.pseudo %v947
    %v949 = vsub.f32 31.0, %v943
    %v951 = vlaneseq
    %v952 = vshrl.u32 %v951, 7
    %v953 = vsub.s32 0, %v952
    %v954 = vrot.slane %v948, %v953
    %v956 = vmul.f32 %v876, %v954
    %v957 = vmul.f32 %v879, %v954
    %v958 = vmul.f32 %v884, %v954
    %v959 = vmul.f32 %v887, %v954
    %v960 = vmul.f32 %v892, %v954
    %v961 = vmul.f32 %v895, %v954
    %v962 = vmul.f32 %v900, %v954
    %v963 = vmul.f32 %v903, %v954
    %v964 = vmul.f32 %v908, %v954
    %v965 = vmul.f32 %v911, %v954
    %v966 = vmul.f32 %v916, %v954
    %v967 = vmul.f32 %v919, %v954
    %v968 = vmul.f32 %v924, %v954
    %v969 = vmul.f32 %v927, %v954
    %v970 = vmul.f32 %v932, %v954
    %v971 = vmul.f32 %v935, %v954
    %v972 = vsub.f32 %v949, 8.0
    %v973 = vsub.f32 0.0, %v972
    %v974 = vpow.pop %v973
    %v976 = vlaneseq
    %v977 = vshrl.u32 %v976, 7
    %v978 = vsub.s32 0, %v977
    %v979 = vrot.slane %v974, %v978
    %v981 = vmul.f32 %v956, %v979
    %v982 = vmul.f32 %v957, %v979
    %v983 = vmul.f32 %v958, %v979
    %v984 = vmul.f32 %v959, %v979
    %v985 = vmul.f32 %v960, %v979
    %v986 = vmul.f32 %v961, %v979
    %v987 = vmul.f32 %v962, %v979
    %v988 = vmul.f32 %v963, %v979
    %v989 = vmul.f32 %v964, %v979
    %v990 = vmul.f32 %v965, %v979
    %v991 = vmul.f32 %v966, %v979
    %v992 = vmul.f32 %v967, %v979
    %v993 = vmul.f32 %v968, %v979
    %v994 = vmul.f32 %v969, %v979
    %v995 = vmul.f32 %v970, %v979
    %v996 = vmul.f32 %v971, %v979
    %v997 = vround.ne.pseudo %v981
    %v998 = vround.ne.pseudo %v982
    %v999 = vround.ne.pseudo %v983
    %v1000 = vround.ne.pseudo %v984
    %v1001 = vround.ne.pseudo %v985
    %v1002 = vround.ne.pseudo %v986
    %v1003 = vround.ne.pseudo %v987
    %v1004 = vround.ne.pseudo %v988
    %v1005 = vround.ne.pseudo %v989
    %v1006 = vround.ne.pseudo %v990
    %v1007 = vround.ne.pseudo %v991
    %v1008 = vround.ne.pseudo %v992
    %v1009 = vround.ne.pseudo %v993
    %v1010 = vround.ne.pseudo %v994
    %v1011 = vround.ne.pseudo %v995
    %v1012 = vround.ne.pseudo %v996
    %v1013 = vmul.f32 %v997, 0.00390625
    %v1014 = vmul.f32 %v998, 0.00390625
    %v1015 = vmul.f32 %v999, 0.00390625
    %v1016 = vmul.f32 %v1000, 0.00390625
    %v1017 = vmul.f32 %v1001, 0.00390625
    %v1018 = vmul.f32 %v1002, 0.00390625
    %v1019 = vmul.f32 %v1003, 0.00390625
    %v1020 = vmul.f32 %v1004, 0.00390625
    %v1021 = vmul.f32 %v1005, 0.00390625
    %v1022 = vmul.f32 %v1006, 0.00390625
    %v1023 = vmul.f32 %v1007, 0.00390625
    %v1024 = vmul.f32 %v1008, 0.00390625
    %v1025 = vmul.f32 %v1009, 0.00390625
    %v1026 = vmul.f32 %v1010, 0.00390625
    %v1027 = vmul.f32 %v1011, 0.00390625
    %v1028 = vmul.f32 %v1012, 0.00390625
    %1029 = vst [vmem:[#allocation3] sm:$0xff] %v1013
    %1030 = vst [vmem:[#allocation3 + $0x8] sm:$0xff] %v1014
    %1031 = vst [vmem:[#allocation3 + $0x10] sm:$0xff] %v1015
    %1032 = vst [vmem:[#allocation3 + $0x18] sm:$0xff] %v1016
    %1033 = vst [vmem:[#allocation3 + $0x20] sm:$0xff] %v1017
    %1034 = vst [vmem:[#allocation3 + $0x28] sm:$0xff] %v1018
    %1035 = vst [vmem:[#allocation3 + $0x30] sm:$0xff] %v1019
    %1036 = vst [vmem:[#allocation3 + $0x38] sm:$0xff] %v1020
    %1037 = vst [vmem:[#allocation3 + $0x40] sm:$0xff] %v1021
    %1038 = vst [vmem:[#allocation3 + $0x48] sm:$0xff] %v1022
    %1039 = vst [vmem:[#allocation3 + $0x50] sm:$0xff] %v1023
    %1040 = vst [vmem:[#allocation3 + $0x58] sm:$0xff] %v1024
    %1041 = vst [vmem:[#allocation3 + $0x60] sm:$0xff] %v1025
    %1042 = vst [vmem:[#allocation3 + $0x68] sm:$0xff] %v1026
    %1043 = vst [vmem:[#allocation3 + $0x70] sm:$0xff] %v1027
    %1044 = vst [vmem:[#allocation3 + $0x78] sm:$0xff] %v1028
    // Predicated region
    $region46: #{tpu_custom_call.1} parent=1 // pred_check
      _
    $region47: #{tpu_custom_call.1} parent=1 // pred_check_branch
      %1046 = sbr.rel (0) target = $region49
    $region48: #{tpu_custom_call.1} parent=1 // pred_region
      %s1048 = ssub.s32 2048, 2048
      %1049 = vsyncadd [#allocation4], %s1048
      %s1050 = sshll.u32 [#allocation3], 4
      %s1051 = int_to_ptr.vmem [resolvable:$true] %s1050
      %1056 = dma.vmem_to_hbm [thread:$0]  %s1051, 2048, %s11, [#allocation4], 128, 128, 8
    $region49: #{tpu_custom_call.1} parent=1 // pred_fallthru
      _
    // Predicated region
    $region50: #{tpu_custom_call.1} parent=1 // pred_check
      _
    $region51: #{tpu_custom_call.1} parent=1 // pred_check_branch
      %1058 = sbr.rel (0) target = $region53
    $region52: #{tpu_custom_call.1} parent=1 // pred_region
      %1059 = dma.done [#allocation4], 2048
    $region53: #{tpu_custom_call.1} parent=1 // pred_fallthru
      _
    %1060 = vsyncpa [#allocation4], 1

</llo_original>
